<compile_context>
chip_gen: v7x
topology: tpu7x:2x2x1
jax: 0.10.0
libtpu: 0.0.40
codegen_flags: <defaults>
</compile_context>

<pallas_src>
import jax
import jax.numpy as jnp
from jax.experimental import pallas as pl
from jax.experimental.pallas import tpu as pltpu


def _split_kernel(x_ref, even_ref, odd_ref):
    # x_ref: (tR, 2*D); even_ref/odd_ref: (tR, D).  Pure lane-slice copy
    # (D is a multiple of 128 on this path, so both slices are lane-aligned).
    d = even_ref.shape[-1]
    x = x_ref[...]
    even_ref[...] = x[:, :d]
    odd_ref[...] = x[:, d:]


def _target_block_bytes():
    """Generation-aware input-block size target (bytes)."""
    vmem = None
    try:
        info = pltpu.get_tpu_info()
        vmem = getattr(info, "vmem_capacity_bytes", None)
    except Exception:
        vmem = None
    if vmem is None:
        # Conservative default that fits every generation (need ~4x + slack).
        return 6 << 20
    if vmem <= (80 << 20):
        # v7x: 64 MiB physical VMEM -> ~6 MiB in-blocks (~26 MiB total need).
        return 6 << 20
    # v5e / v6e: 128 MiB physical VMEM -> ~12 MiB in-blocks (~50 MiB need).
    return 12 << 20


def _choose_row_block(num_rows, row_bytes, sublane_mult, target_bytes):
    """Pick a sublane-aligned row-block size near target_bytes per input block.

    Prefers a block size that divides num_rows exactly (no ragged tail DMA or
    masked tail stores); among divisors, prefers an even block count so the
    "parallel" grid axis load-balances across v7x's two TensorCores.
    """
    t_r = max(1, target_bytes // max(1, row_bytes))
    if t_r >= num_rows:
        return num_rows                        # single full-extent block
    t_r = max(sublane_mult, (t_r // sublane_mult) * sublane_mult)
    t_r = min(t_r, num_rows)

    best_div, best_even = None, None
    lo = max(sublane_mult, t_r // 2)           # don't shrink below half target
    cand = t_r
    while cand >= lo:
        if num_rows % cand == 0:
            if best_div is None:
                best_div = cand
            if (num_rows // cand) % 2 == 0:
                best_even = cand
                break
        cand -= sublane_mult
    if best_even is not None:
        return best_even
    if best_div is not None:
        return best_div
    return t_r                                  # accept a ragged (masked) tail


def splitting(x, *, force_pallas=False, min_pallas_bytes=2 << 20,
              target_block_bytes=None):
    """Returns (even, odd) = (x[:, ::2, :], x[:, 1::2, :]).  x: (B, T, D)."""
    B, T, D = x.shape
    itemsize = jnp.dtype(x.dtype).itemsize
    total_bytes = B * T * D * itemsize

    lane_aligned = (D % 128 == 0)
    big_enough = force_pallas or (total_bytes >= min_pallas_bytes)
    # Odd T, non-lane-multiple D, or small input: native XLA slicing is the
    # right tool (lane-unaligned D would force XLU rotates + masked stores;
    # small inputs are dominated by kernel dispatch overhead).
    # TODO(synk): a pure-DMA (strided HBM->HBM make_async_copy) variant could
    #             cover non-128-multiple D at the roofline; not needed here.
    if (T % 2 != 0) or (not lane_aligned) or (not big_enough):
        return x[:, ::2, :], x[:, 1::2, :]

    Th = T // 2
    R = B * Th                                 # flattened (batch, even-time) rows
    two_d = 2 * D

    # Free row-major reshape: each row becomes [even_row | odd_row] in lanes.
    xr = x.reshape(R, two_d)

    sublane_mult = max(8, 32 // itemsize)      # 8 f32, 16 bf16, 32 int8
    tgt = (target_block_bytes if target_block_bytes is not None
           else _target_block_bytes())
    t_r = _choose_row_block(R, two_d * itemsize, sublane_mult, tgt)
    grid = (pl.cdiv(R, t_r),)

    block_in_bytes = t_r * two_d * itemsize
    # Actual need: double-buffered (in-block + 2 out-blocks) = ~4x block_in,
    # plus slack for compiler-internal scratch.  Floor keeps us off the tiny
    # default scoped limit; stays well under 64 MiB even on v7x.
    vmem_bytes = int(max(16 << 20, 4 * block_in_bytes + (2 << 20)))

    out_shapes = (
        jax.ShapeDtypeStruct((R, D), x.dtype),
        jax.ShapeDtypeStruct((R, D), x.dtype),
    )

    even_flat, odd_flat = pl.pallas_call(
        _split_kernel,
        out_shape=out_shapes,
        grid_spec=pltpu.PrefetchScalarGridSpec(
            num_scalar_prefetch=0,
            grid=grid,
            in_specs=[pl.BlockSpec((t_r, two_d), lambda i: (i, 0))],
            out_specs=(
                pl.BlockSpec((t_r, D), lambda i: (i, 0)),
                pl.BlockSpec((t_r, D), lambda i: (i, 0)),
            ),
        ),
        compiler_params=pltpu.CompilerParams(
            dimension_semantics=("parallel",),
            vmem_limit_bytes=vmem_bytes,
        ),
        # Pure memory-bound op: each byte read once + written once.
        cost_estimate=pl.CostEstimate(
            flops=0, transcendentals=0, bytes_accessed=2 * total_bytes),
    )(xr)

    # Free reshapes back to (B, Th, D).
    return even_flat.reshape(B, Th, D), odd_flat.reshape(B, Th, D)


if __name__ == "__main__":
    def check(x, **kw):
        even, odd = splitting(x, **kw)
        even = jax.block_until_ready(even)
        odd = jax.block_until_ready(odd)
        ref_even = x[:, ::2, :]
        ref_odd = x[:, 1::2, :]
        assert even.shape == ref_even.shape and odd.shape == ref_odd.shape
        assert jnp.array_equal(even, ref_even)
        assert jnp.array_equal(odd, ref_odd)

    # 1) Small shape consistent with the module (batch=2, seq=8, hidden=128);
    #    D is a lane multiple so this exercises the single-block Pallas path.
    x1 = jax.random.normal(jax.random.PRNGKey(0), (2, 8, 128), dtype=jnp.float32)
    check(x1, force_pallas=True)

    # 2) Multi-block tiled path (tiny target block so the grid has several
    #    steps; production shapes pick 6-12 MiB blocks automatically).
    x2 = jax.random.normal(jax.random.PRNGKey(1), (4, 256, 128), dtype=jnp.float32)
    check(x2, force_pallas=True, target_block_bytes=64 * 1024)

    # 3) Ragged-tail coverage: R = 127 rows with 8-row blocks -> masked last block.
    x3 = jax.random.normal(jax.random.PRNGKey(2), (1, 254, 128), dtype=jnp.float32)
    check(x3, force_pallas=True, target_block_bytes=8 * 1024)

    # 4) Row count not a sublane multiple (single full-extent block is legal).
    x4 = jax.random.normal(jax.random.PRNGKey(3), (3, 10, 128), dtype=jnp.float32)
    check(x4, force_pallas=True)

    # 5) Fallback path: odd T / non-128-multiple D use native XLA slicing.
    x5 = jax.random.normal(jax.random.PRNGKey(4), (2, 7, 32), dtype=jnp.float32)
    check(x5)

    print("KERNEL_OK")
</pallas_src>

<mosaic_0001>
module attributes {stable_mosaic.version = 11 : i64} {
  func.func @_split_kernel(%arg0: i32, %arg1: memref<8x256xf32, #tpu.memory_space<vmem>>, %arg2: memref<8x128xf32, #tpu.memory_space<vmem>>, %arg3: memref<8x128xf32, #tpu.memory_space<vmem>>) attributes {dimension_semantics = [#tpu.dimension_semantics<parallel>], iteration_bounds = array<i64: 1>, scalar_prefetch = 0 : i64, scratch_operands = 0 : i64, tpu.core_type = #tpu.core_type<tc>, window_params = [{transform_indices = @transform_0, window_bounds = array<i64: 8, 256>}, {transform_indices = @transform_1, window_bounds = array<i64: 8, 128>}, {transform_indices = @transform_2, window_bounds = array<i64: 8, 128>}]} {
    %c0 = arith.constant 0 : index
    %c0_0 = arith.constant 0 : index
    %0 = vector.load %arg1[%c0, %c0_0] : memref<8x256xf32, #tpu.memory_space<vmem>>, vector<8x256xf32>
    %1 = vector.extract_strided_slice %0 {offsets = [0, 0], sizes = [8, 128], strides = [1, 1]} : vector<8x256xf32> to vector<8x128xf32>
    %c0_1 = arith.constant 0 : index
    %c0_2 = arith.constant 0 : index
    %2 = vector.load %arg2[%c0_1, %c0_2] : memref<8x128xf32, #tpu.memory_space<vmem>>, vector<8x128xf32>
    tpu.vector_store %arg2[%c0_1, %c0_2], %1 {strides = array<i32>} : memref<8x128xf32, #tpu.memory_space<vmem>>, vector<8x128xf32>,
    %3 = vector.extract_strided_slice %0 {offsets = [0, 128], sizes = [8, 128], strides = [1, 1]} : vector<8x256xf32> to vector<8x128xf32>
    %c0_3 = arith.constant 0 : index
    %c0_4 = arith.constant 0 : index
    %4 = vector.load %arg3[%c0_3, %c0_4] : memref<8x128xf32, #tpu.memory_space<vmem>>, vector<8x128xf32>
    tpu.vector_store %arg3[%c0_3, %c0_4], %3 {strides = array<i32>} : memref<8x128xf32, #tpu.memory_space<vmem>>, vector<8x128xf32>,
    return
  }
  func.func @transform_0(%arg0: i32) -> (i32, i32) {
    %c0_i32 = arith.constant 0 : i32
    %c0_i32_0 = arith.constant 0 : i32
    return %arg0, %c0_i32 : i32, i32
  }
  func.func @transform_1(%arg0: i32) -> (i32, i32) {
    %c0_i32 = arith.constant 0 : i32
    %c0_i32_0 = arith.constant 0 : i32
    return %arg0, %c0_i32 : i32, i32
  }
  func.func @transform_2(%arg0: i32) -> (i32, i32) {
    %c0_i32 = arith.constant 0 : i32
    %c0_i32_0 = arith.constant 0 : i32
    return %arg0, %c0_i32 : i32, i32
  }
}

</mosaic_0001>

<llo_original>
// kernel: tpu_custom_call.1
$region0: #{tpu_custom_call.1}
  #allocation0 [shape = 'u32[]', space=smem, size = 0x4, offset = 0x4, fixed_abs, tag = 'smem constant byte address 0x4 - core index']
  #allocation1 [shape = 'u32[144,128]{1,0:T(1,128)}', space=vmem, size = 0x12000, scoped, tag = 'internal scratch']
  %s0 = inlined_call_operand.hbm [shape: f32[8,256], index: 0, kind: input, shape index: {}]
  %s1 = inlined_call_operand.hbm [shape: f32[8,128], index: 1, kind: output, shape index: {0}]
  %s2 = inlined_call_operand.hbm [shape: f32[8,128], index: 2, kind: output, shape index: {1}]
  %3 = xla_tuple %s1, %s2
  %s4 = sld [smem:[#allocation0]]
  $region26: #{tpu_custom_call.1} parent=0
    _
  %s6 = ssub.s32 1, %s4
  %s7 = scalar_select 0, %s6, %s4
  $region1: #{tpu_custom_call.1} parent=0
    #allocation2 [shape = 'u8[8192]{0}', space=vmem, size = 0x2000, scoped, tag = 'input window, operand 0, single buffered']
    #allocation3 [shape = 's32[1]{0}', space=sflag, size = 0x4, scoped, tag = 'scoped memory for tpu_custom_call.1']
    #allocation4 [shape = 's32[1]{0}', space=sflag, size = 0x4, scoped, tag = 'scoped memory for tpu_custom_call.1']
    #allocation5 [shape = 'u8[4096]{0}', space=vmem, size = 0x1000, scoped, tag = 'output window, operand 0, single buffered']
    #allocation6 [shape = 'u8[4096]{0}', space=vmem, size = 0x1000, scoped, tag = 'output window, operand 1, single buffered']
    #allocation7 [shape = 's32[1]{0}', space=sflag, size = 0x4, scoped, tag = 'scoped memory for tpu_custom_call.1']
    %8 = vsyncpa [#allocation3], 0
    %9 = vsyncpa [#allocation4], 0
    %10 = vsyncpa [#allocation7], 0
    // Predicated region
    $region2: #{tpu_custom_call.1} parent=1 // pred_check
      _
    $region3: #{tpu_custom_call.1} parent=1 // pred_check_branch
      %12 = sbr.rel (0) target = $region5
    $region4: #{tpu_custom_call.1} parent=1 // pred_region
      %s14 = ssub.s32 256, 256
      %15 = vsyncadd [#allocation3], %s14
      %s17 = sshll.u32 [#allocation2], 4
      %s18 = int_to_ptr.vmem [resolvable:$true] %s17
      %20 = dma.hbm_to_vmem [thread:$0]  %s0, 256, %s18, [#allocation3]
    $region5: #{tpu_custom_call.1} parent=1 // pred_fallthru
      _
    // Predicated region
    $region6: #{tpu_custom_call.1} parent=1 // pred_check
      _
    $region7: #{tpu_custom_call.1} parent=1 // pred_check_branch
      %22 = sbr.rel (0) target = $region9
    $region8: #{tpu_custom_call.1} parent=1 // pred_region
      %23 = dma.done [#allocation3], 256
    $region9: #{tpu_custom_call.1} parent=1 // pred_fallthru
      _
    %v24 = vld [vmem:[#allocation2] sm:$0xff]
    %v25 = vld [vmem:[#allocation2 + $0x8] sm:$0xff]
    %26 = vst [vmem:[#allocation5] sm:$0xff] %v24
    %27 = vst [vmem:[#allocation6] sm:$0xff] %v25
    // Predicated region
    $region10: #{tpu_custom_call.1} parent=1 // pred_check
      _
    $region11: #{tpu_custom_call.1} parent=1 // pred_check_branch
      %29 = sbr.rel (0) target = $region13
    $region12: #{tpu_custom_call.1} parent=1 // pred_region
      %s31 = ssub.s32 128, 128
      %32 = vsyncadd [#allocation4], %s31
      %s34 = sshll.u32 [#allocation5], 4
      %s35 = int_to_ptr.vmem [resolvable:$true] %s34
      %37 = dma.vmem_to_hbm [thread:$0]  %s35, 128, %s1, [#allocation4]
    $region13: #{tpu_custom_call.1} parent=1 // pred_fallthru
      _
    // Predicated region
    $region14: #{tpu_custom_call.1} parent=1 // pred_check
      _
    $region15: #{tpu_custom_call.1} parent=1 // pred_check_branch
      %39 = sbr.rel (0) target = $region17
    $region16: #{tpu_custom_call.1} parent=1 // pred_region
      %s41 = ssub.s32 128, 128
      %42 = vsyncadd [#allocation7], %s41
      %s44 = sshll.u32 [#allocation6], 4
      %s45 = int_to_ptr.vmem [resolvable:$true] %s44
      %47 = dma.vmem_to_hbm [thread:$0]  %s45, 128, %s2, [#allocation7]
    $region17: #{tpu_custom_call.1} parent=1 // pred_fallthru
      _
    // Predicated region
    $region18: #{tpu_custom_call.1} parent=1 // pred_check
      _
    $region19: #{tpu_custom_call.1} parent=1 // pred_check_branch
      %49 = sbr.rel (0) target = $region21
    $region20: #{tpu_custom_call.1} parent=1 // pred_region
      %50 = dma.done [#allocation4], 128
    $region21: #{tpu_custom_call.1} parent=1 // pred_fallthru
      _
    // Predicated region
    $region22: #{tpu_custom_call.1} parent=1 // pred_check
      _
    $region23: #{tpu_custom_call.1} parent=1 // pred_check_branch
      %52 = sbr.rel (0) target = $region25
    $region24: #{tpu_custom_call.1} parent=1 // pred_region
      %53 = dma.done [#allocation7], 128
    $region25: #{tpu_custom_call.1} parent=1 // pred_fallthru
      _
    %54 = vsyncpa [#allocation3], 1
    %55 = vsyncpa [#allocation4], 1
    %56 = vsyncpa [#allocation7], 1

</llo_original>
